<compile_context>
chip_gen: v7x
topology: tpu7x:2x2x1
jax: 0.10.0
libtpu: 0.0.40
codegen_flags: <defaults>
</compile_context>

<pallas_src>
import jax
import jax.numpy as jnp
from jax.experimental import pallas as pl
from jax.experimental.pallas import tpu as pltpu


def copy_kernel(x_ref, o_ref):
    # Identity copy of identically-shaped blocks; the flatten itself is a metadata
    # reshape done in the wrapper.
    o_ref[...] = x_ref[...]


def _pick_cols(total):
    """Largest multiple-of-128 divisor of `total` (capped), 0 if 128 doesn't divide it."""
    if total % 128:
        return 0
    best = 128
    c = 128
    cap = min(total, 4096)
    while c <= cap:
        if total % c == 0:
            best = c
        c += 128
    return best


def _tile_rows_for(rows, row_bytes, itemsize, target_bytes=4 * 1024 * 1024):
    """Row-tile size: ~4 MiB per tile, aligned to the dtype's sublane packing."""
    sublane = max(8, 32 // max(1, itemsize))        # 8 for f32, 16 for bf16, 32 for int8
    t = max(sublane, target_bytes // max(1, row_bytes))
    t -= t % sublane
    t = max(t, sublane)
    if t >= rows:
        return rows                                  # full extent is always a legal block dim
    return t


def _identity_copy_2d(x2):
    """Lane-dense Pallas identity copy of a (rows, cols) array (fusion host)."""
    rows, cols = x2.shape
    itemsize = jnp.dtype(x2.dtype).itemsize
    tile_rows = _tile_rows_for(rows, cols * itemsize, itemsize)
    grid = (pl.cdiv(rows, tile_rows),)               # ragged last block handled by Pallas
    return pl.pallas_call(
        copy_kernel,
        out_shape=jax.ShapeDtypeStruct((rows, cols), x2.dtype),
        grid_spec=pltpu.PrefetchScalarGridSpec(
            num_scalar_prefetch=0,
            grid=grid,
            in_specs=[pl.BlockSpec((tile_rows, cols), lambda i: (i, 0))],
            out_specs=pl.BlockSpec((tile_rows, cols), lambda i: (i, 0)),
        ),
        compiler_params=pltpu.CompilerParams(
            dimension_semantics=("parallel",),       # allows megacore sharding on v7x
            vmem_limit_bytes=32 * 1024 * 1024,       # double-buffered in+out at 4 MiB tiles
        ),
        input_output_aliases={0: 0},                 # reuse input HBM buffer when donatable
        cost_estimate=pl.CostEstimate(
            flops=0, transcendentals=0,
            bytes_accessed=2 * rows * cols * itemsize),
    )(x2)


def flatten12(x):
    """Module forward: torch.flatten(x, 1, 2). Free, layout-preserving metadata reshape."""
    N, C, H, W = x.shape
    return jnp.reshape(x, (N, C * H, W))


def flatten12_pallas(x):
    """Same semantics, routed through the Pallas identity-copy fusion host."""
    N, C, H, W = x.shape
    out_shape = (N, C * H, W)
    total = N * C * H * W

    cols = _pick_cols(total)
    if cols:
        rows = total // cols
        y2 = _identity_copy_2d(jnp.reshape(x, (rows, cols)))   # lane-dense, unmasked stores
        return jnp.reshape(y2, out_shape)

    # Fallback (total not a multiple of 128): row-tiled copy of the (N*C*H, W) view.
    # Last dim equals the full array dim so the (8,128) rule holds; stores may be masked
    # if W < 128, but VMEM stays bounded on every generation.
    rows = N * C * H
    y2 = _identity_copy_2d(jnp.reshape(x, (rows, W)))
    return jnp.reshape(y2, out_shape)


if __name__ == "__main__":
    key = jax.random.PRNGKey(0)
    x = jax.random.normal(key, (2, 4, 16, 16), dtype=jnp.float32)

    ref = jnp.reshape(x, (2, 4 * 16, 16))

    # Optimal path (what the module forward should be): pure metadata reshape.
    y = flatten12(x)
    jax.block_until_ready(y)
    assert y.shape == (2, 64, 16), y.shape
    assert jnp.array_equal(y, ref), "flatten12 mismatch vs reference reshape"

    # Pallas fusion-host variant, exercised once on TPU for correctness.
    yp = flatten12_pallas(x)
    jax.block_until_ready(yp)
    assert yp.shape == (2, 64, 16), yp.shape
    assert jnp.array_equal(yp, ref), "flatten12_pallas mismatch vs reference reshape"

    print("KERNEL_OK")
</pallas_src>

<mosaic_0001>
module attributes {stable_mosaic.version = 11 : i64} {
  func.func @copy_kernel(%arg0: i32, %arg1: memref<1x2048xf32, #tpu.memory_space<vmem>>, %arg2: memref<1x2048xf32, #tpu.memory_space<vmem>>) attributes {dimension_semantics = [#tpu.dimension_semantics<parallel>], iteration_bounds = array<i64: 1>, scalar_prefetch = 0 : i64, scratch_operands = 0 : i64, tpu.core_type = #tpu.core_type<tc>, window_params = [{transform_indices = @transform_0, window_bounds = array<i64: 1, 2048>}, {transform_indices = @transform_1, window_bounds = array<i64: 1, 2048>}]} {
    %c0 = arith.constant 0 : index
    %c0_0 = arith.constant 0 : index
    %0 = vector.load %arg1[%c0, %c0_0] : memref<1x2048xf32, #tpu.memory_space<vmem>>, vector<1x2048xf32>
    %c0_1 = arith.constant 0 : index
    %c0_2 = arith.constant 0 : index
    %1 = vector.load %arg2[%c0_1, %c0_2] : memref<1x2048xf32, #tpu.memory_space<vmem>>, vector<1x2048xf32>
    tpu.vector_store %arg2[%c0_1, %c0_2], %0 {strides = array<i32>} : memref<1x2048xf32, #tpu.memory_space<vmem>>, vector<1x2048xf32>,
    return
  }
  func.func @transform_0(%arg0: i32) -> (i32, i32) {
    %c0_i32 = arith.constant 0 : i32
    %c0_i32_0 = arith.constant 0 : i32
    return %arg0, %c0_i32 : i32, i32
  }
  func.func @transform_1(%arg0: i32) -> (i32, i32) {
    %c0_i32 = arith.constant 0 : i32
    %c0_i32_0 = arith.constant 0 : i32
    return %arg0, %c0_i32 : i32, i32
  }
}

</mosaic_0001>

<llo_original>
// kernel: tpu_custom_call.1
$region0: #{tpu_custom_call.1}
  #allocation0 [shape = 'u32[]', space=smem, size = 0x4, offset = 0x4, fixed_abs, tag = 'smem constant byte address 0x4 - core index']
  #allocation1 [shape = 'u32[144,128]{1,0:T(1,128)}', space=vmem, size = 0x12000, scoped, tag = 'internal scratch']
  %s0 = inlined_call_operand.hbm [shape: f32[1,2048], index: 0, kind: input, shape index: {}, may-alias: {0,1}]
  %s1 = inlined_call_operand.hbm [shape: f32[1,2048], index: 1, kind: output, shape index: {}, may-alias: {0,1}]
  %s2 = sld [smem:[#allocation0]]
  $region18: #{tpu_custom_call.1} parent=0
    _
  %s4 = ssub.s32 1, %s2
  %s5 = scalar_select 0, %s4, %s2
  $region1: #{tpu_custom_call.1} parent=0
    #allocation2 [shape = 'u8[8192]{0}', space=vmem, size = 0x2000, scoped, tag = 'input window, operand 0, single buffered']
    #allocation3 [shape = 's32[1]{0}', space=sflag, size = 0x4, scoped, tag = 'scoped memory for tpu_custom_call.1']
    #allocation4 [shape = 's32[1]{0}', space=sflag, size = 0x4, scoped, tag = 'scoped memory for tpu_custom_call.1']
    #allocation5 [shape = 'u8[8192]{0}', space=vmem, size = 0x2000, scoped, tag = 'output window, operand 0, single buffered']
    %6 = vsyncpa [#allocation3], 0
    %7 = vsyncpa [#allocation4], 0
    // Predicated region
    $region2: #{tpu_custom_call.1} parent=1 // pred_check
      _
    $region3: #{tpu_custom_call.1} parent=1 // pred_check_branch
      %9 = sbr.rel (0) target = $region5
    $region4: #{tpu_custom_call.1} parent=1 // pred_region
      %s11 = ssub.s32 256, 256
      %12 = vsyncadd [#allocation3], %s11
      %s14 = sshll.u32 [#allocation2], 4
      %s15 = int_to_ptr.vmem [resolvable:$true] %s14
      %17 = dma.hbm_to_vmem [thread:$0]  %s0, 256, %s15, [#allocation3]
    $region5: #{tpu_custom_call.1} parent=1 // pred_fallthru
      _
    // Predicated region
    $region6: #{tpu_custom_call.1} parent=1 // pred_check
      _
    $region7: #{tpu_custom_call.1} parent=1 // pred_check_branch
      %19 = sbr.rel (0) target = $region9
    $region8: #{tpu_custom_call.1} parent=1 // pred_region
      %20 = dma.done [#allocation3], 256
    $region9: #{tpu_custom_call.1} parent=1 // pred_fallthru
      _
    %v21 = vld [vmem:[#allocation2] sm:$0xff]
    %v22 = vld [vmem:[#allocation2 + $0x8] sm:$0xff]
    %23 = vst [vmem:[#allocation5] sm:$0xff] %v21
    %24 = vst [vmem:[#allocation5 + $0x8] sm:$0xff] %v22
    // Predicated region
    $region10: #{tpu_custom_call.1} parent=1 // pred_check
      _
    $region11: #{tpu_custom_call.1} parent=1 // pred_check_branch
      %26 = sbr.rel (0) target = $region13
    $region12: #{tpu_custom_call.1} parent=1 // pred_region
      %s28 = ssub.s32 256, 256
      %29 = vsyncadd [#allocation4], %s28
      %s31 = sshll.u32 [#allocation5], 4
      %s32 = int_to_ptr.vmem [resolvable:$true] %s31
      %34 = dma.vmem_to_hbm [thread:$0]  %s32, 256, %s1, [#allocation4]
    $region13: #{tpu_custom_call.1} parent=1 // pred_fallthru
      _
    // Predicated region
    $region14: #{tpu_custom_call.1} parent=1 // pred_check
      _
    $region15: #{tpu_custom_call.1} parent=1 // pred_check_branch
      %36 = sbr.rel (0) target = $region17
    $region16: #{tpu_custom_call.1} parent=1 // pred_region
      %37 = dma.done [#allocation4], 256
    $region17: #{tpu_custom_call.1} parent=1 // pred_fallthru
      _
    %38 = vsyncpa [#allocation3], 1
    %39 = vsyncpa [#allocation4], 1

</llo_original>
